<compile_context>
chip_gen: v6e
topology: v6e:2x2x1
jax: 0.10.0
libtpu: 0.0.40
codegen_flags: <defaults>
</compile_context>

<pallas_src>
import jax
import jax.numpy as jnp
from jax.experimental import pallas as pl
from jax.experimental.pallas import tpu as pltpu

# ---- loss weights (defaults from PoseModel.__init__) ------------------------
W_EUCLIDEAN = 1.0
W_NORMAL = 0.8
W_PULLBACK = 0.1
COSINE_EPS = 1e-8                     # torch.cosine_similarity default eps
_COSINE_EPS_SQ = COSINE_EPS * COSINE_EPS

LANE = 128                            # TPU lane width
NUM_SHARDS = 2                        # leading "parallel" grid axis (2 TCs on v7x)


# =============================================================================
# Pallas kernel: masked euclidean / cosine-normal partial reductions over the
# matched point pairs, SoA (3, M) layout, tiled along the lane (M) axis.
# =============================================================================
def _pose_partials_kernel(wpts_ref, cpts_ref, wnrm_ref, cnrm_ref, out_ref,
                          acc_e, acc_ec, acc_n, acc_nc):
    t = pl.program_id(1)

    @pl.when(t == 0)
    def _init():
        acc_e[...] = jnp.zeros_like(acc_e)
        acc_ec[...] = jnp.zeros_like(acc_ec)
        acc_n[...] = jnp.zeros_like(acc_n)
        acc_nc[...] = jnp.zeros_like(acc_nc)

    wp = wpts_ref[...]                # (3, T) world points (matched)
    cp = cpts_ref[...]                # (3, T) current (rendered) points
    wn = wnrm_ref[...]                # (3, T) world normals
    cn = cnrm_ref[...]                # (3, T) current normals

    # Row mask: NaN test on the x coordinate of the current point, mirroring
    # torch.logical_not(torch.isnan(points_packed()[match[:, 1]]))[:, 0].
    row_valid = jnp.logical_not(jnp.isnan(cp[0:1, :]))            # (1, T)

    # ---- euclidean partials: pure element-wise accumulate (VPU only) --------
    d2 = (wp - cp) ** 2                                           # (3, T)
    ev = jnp.logical_and(row_valid, jnp.logical_not(jnp.isnan(d2)))
    acc_e[...] += jnp.where(ev, d2, 0.0)
    acc_ec[...] += ev.astype(jnp.float32)

    # ---- normal partials: 1 - cosine_similarity(dim=1) ----------------------
    # Per-row dot / squared norms are 3-deep sublane sums; the 128-lane reduce
    # is deferred to the finalize branch.  rsqrt goes to the EUP slot.
    dot = jnp.sum(wn * cn, axis=0, keepdims=True)                 # (1, T)
    n1s = jnp.sum(wn * wn, axis=0, keepdims=True)
    n2s = jnp.sum(cn * cn, axis=0, keepdims=True)
    inv_norms = (jax.lax.rsqrt(jnp.maximum(n1s, _COSINE_EPS_SQ)) *
                 jax.lax.rsqrt(jnp.maximum(n2s, _COSINE_EPS_SQ)))
    nrow = 1.0 - dot * inv_norms                                  # (1, T)
    nv = jnp.logical_and(row_valid, jnp.logical_not(jnp.isnan(nrow)))
    acc_n[...] += jnp.where(nv, nrow, 0.0)
    acc_nc[...] += nv.astype(jnp.float32)

    # ---- finalize: single cross-lane reduce per shard ------------------------
    @pl.when(t == pl.num_programs(1) - 1)
    def _finalize():
        e_sum = jnp.sum(acc_e[...], keepdims=True)                # (1, 1)
        e_cnt = jnp.sum(acc_ec[...], keepdims=True)
        n_sum = jnp.sum(acc_n[...], keepdims=True)
        n_cnt = jnp.sum(acc_nc[...], keepdims=True)
        payload = jnp.concatenate([e_sum, e_cnt, n_sum, n_cnt], axis=1)  # (1,4)
        out_ref[...] = jnp.zeros_like(out_ref)                    # (8, 128) slab
        out_ref[0:1, 0:4] = payload


def _pick_tile(num_rows, num_shards):
    """Lane-axis tile width, derived per TPU generation.

    Streaming VMEM cost per lane of tile width (f32, sublane-padded to 8):
      4 inputs x 2 pipeline buffers x 32 B   = 256 B
      4 scratch accumulators (padded)        = 128 B
    Budget ~1/4 of physical VMEM so usage stays well under the default scoped
    limit: v5e/v6e (128 MiB) -> 64K-lane cap, v7x (64 MiB) -> ~43K lanes.
    """
    rows_per_shard = -(-num_rows // num_shards)
    need = max(LANE, ((rows_per_shard + LANE - 1) // LANE) * LANE)
    try:
        vmem_bytes = pltpu.get_tpu_info().vmem_capacity_bytes
    except Exception:
        vmem_bytes = 64 * 1024 * 1024        # conservative (v7x) fallback
    budget = vmem_bytes // 4
    cap = max(LANE, min((budget // 384 // LANE) * LANE, 64 * 1024))
    return min(need, cap)


def pose_loss_partials_pallas(wpts_t, cpts_t, wnrm_t, cnrm_t,
                              num_shards, tiles_per_shard, tile):
    """Masked partial sums per shard.

    Inputs: SoA float32 arrays of shape (3, num_shards*tiles_per_shard*tile),
    NaN-padded.  Returns (num_shards, 4): [e_sum, e_cnt, n_sum, n_cnt].
    """
    data_spec = pl.BlockSpec((3, tile),
                             lambda s, t: (0, s * tiles_per_shard + t))
    out2d = pl.pallas_call(
        _pose_partials_kernel,
        out_shape=jax.ShapeDtypeStruct((num_shards * 8, LANE), jnp.float32),
        grid_spec=pltpu.PrefetchScalarGridSpec(
            num_scalar_prefetch=0,
            grid=(num_shards, tiles_per_shard),
            in_specs=[data_spec, data_spec, data_spec, data_spec],
            out_specs=pl.BlockSpec((8, LANE), lambda s, t: (s, 0)),
            scratch_shapes=[pltpu.VMEM((3, tile), jnp.float32),   # acc_e
                            pltpu.VMEM((3, tile), jnp.float32),   # acc_ec
                            pltpu.VMEM((1, tile), jnp.float32),   # acc_n
                            pltpu.VMEM((1, tile), jnp.float32)],  # acc_nc
        ),
        compiler_params=pltpu.CompilerParams(
            dimension_semantics=("parallel", "arbitrary")),
    )(wpts_t, cpts_t, wnrm_t, cnrm_t)
    return out2d.reshape(num_shards, 8, LANE)[:, 0, 0:4]


# =============================================================================
# Glue (plain JAX): Rodrigues rotation, camera center, gathers, finalize.
# =============================================================================
def rodrigues_rotation(r_vec):
    """Camera3DPoseRodriguesRotFormula.get_rotation_matrix for N=1.
    r_vec: (1, 3) axis-angle -> (3, 3) rotation matrix (float32; the PyTorch
    module uses float64 pose parameters)."""
    r = r_vec[0]
    theta = jnp.sqrt(jnp.sum(r * r) + 1e-30)
    k = r / theta
    K = jnp.array([[0.0, -k[2], k[1]],
                   [k[2], 0.0, -k[0]],
                   [-k[1], k[0], 0.0]], dtype=r.dtype)
    I = jnp.eye(3, dtype=r.dtype)
    return I + jnp.sin(theta) * K + (1.0 - jnp.cos(theta)) * (K @ K)


def camera_center_from_RT(R, T):
    """pytorch3d convention: X_cam = X_world @ R + T  =>  C = -T @ R^T."""
    return (-(T @ R.T)).reshape(1, 3)


@jax.jit
def pose_model_forward(r_param, t_param,
                       world_pts, world_nrm,
                       cur_pts, cur_nrm,
                       match, inter_pts):
    """Replicates PoseModel.forward() loss computation."""
    R = rodrigues_rotation(r_param)                              # (3, 3)
    cam_center = camera_center_from_RT(R, t_param[0]).astype(jnp.float32)

    # Gather matched rows and switch to SoA (3, M): M maps to the lane axis.
    wpts = jnp.take(world_pts, match[:, 0], axis=0).T            # (3, M)
    wnrm = jnp.take(world_nrm, match[:, 0], axis=0).T
    cpts = jnp.take(cur_pts, match[:, 1], axis=0).T
    cnrm = jnp.take(cur_nrm, match[:, 1], axis=0).T

    m = match.shape[0]
    tile = _pick_tile(m, NUM_SHARDS)
    rows_per_shard = -(-m // NUM_SHARDS)
    tiles_per_shard = max(1, -(-rows_per_shard // tile))
    m_pad = NUM_SHARDS * tiles_per_shard * tile

    # NaN padding: padded rows fail the NaN row/element masks in-kernel,
    # exactly like unmatched / invalid rows in the PyTorch reference.
    pad = ((0, 0), (0, m_pad - m))
    nanpad = lambda a: jnp.pad(a.astype(jnp.float32), pad,
                               constant_values=float("nan"))
    partials = pose_loss_partials_pallas(
        nanpad(wpts), nanpad(cpts), nanpad(wnrm), nanpad(cnrm),
        NUM_SHARDS, tiles_per_shard, tile)                       # (shards, 4)

    e_sum, e_cnt, n_sum, n_cnt = jnp.sum(partials, axis=0)
    eucl = e_sum / e_cnt      # NaN when no valid matches, like torch .mean()
    nloss = n_sum / n_cnt

    # Pull-back term: O(P) with tiny P, so fused plain JAX is the right tool.
    cam_d = jnp.sqrt(jnp.mean(cam_center ** 2))
    int_d = jnp.sqrt(jnp.mean(inter_pts ** 2))
    int_cam_d = jnp.sqrt(jnp.mean((inter_pts - cam_center) ** 2))
    pull = jax.nn.sigmoid(-40.0 * (cam_d - int_d)) * int_cam_d

    total = W_EUCLIDEAN * eucl + W_NORMAL * nloss + W_PULLBACK * pull
    total = jnp.where(jnp.isnan(total), pull, total)             # NaN fallback

    losses = {"euclidean": eucl, "normal": nloss, "pull-back": pull}
    return total, losses


def _reference_forward(r_param, t_param, world_pts, world_nrm,
                       cur_pts, cur_nrm, match, inter_pts):
    """Pure-JAX mirror of PoseModel.forward() for correctness checking."""
    R = rodrigues_rotation(r_param)
    cam = camera_center_from_RT(R, t_param[0]).astype(jnp.float32)
    wpts = jnp.take(world_pts, match[:, 0], axis=0)
    wnrm = jnp.take(world_nrm, match[:, 0], axis=0)
    cpts = jnp.take(cur_pts, match[:, 1], axis=0)
    cnrm = jnp.take(cur_nrm, match[:, 1], axis=0)
    row_valid = jnp.logical_not(jnp.isnan(cpts[:, 0]))
    d2 = (wpts - cpts) ** 2
    ev = jnp.logical_and(row_valid[:, None], jnp.logical_not(jnp.isnan(d2)))
    eucl = jnp.sum(jnp.where(ev, d2, 0.0)) / jnp.sum(ev.astype(jnp.float32))
    dot = jnp.sum(wnrm * cnrm, axis=1)
    n1 = jnp.sqrt(jnp.sum(wnrm * wnrm, axis=1))
    n2 = jnp.sqrt(jnp.sum(cnrm * cnrm, axis=1))
    cos = dot / (jnp.maximum(n1, COSINE_EPS) * jnp.maximum(n2, COSINE_EPS))
    nrow = 1.0 - cos
    nv = jnp.logical_and(row_valid, jnp.logical_not(jnp.isnan(nrow)))
    nloss = jnp.sum(jnp.where(nv, nrow, 0.0)) / jnp.sum(nv.astype(jnp.float32))
    cam_d = jnp.sqrt(jnp.mean(cam ** 2))
    int_d = jnp.sqrt(jnp.mean(inter_pts ** 2))
    icd = jnp.sqrt(jnp.mean((inter_pts - cam) ** 2))
    pull = jax.nn.sigmoid(-40.0 * (cam_d - int_d)) * icd
    total = W_EUCLIDEAN * eucl + W_NORMAL * nloss + W_PULLBACK * pull
    return jnp.where(jnp.isnan(total), pull, total)


# =============================================================================
# Driver
# =============================================================================
if __name__ == "__main__":
    key = jax.random.PRNGKey(0)
    kw, kc, knw, knc, ki = jax.random.split(key, 5)

    Nw, Nc, M, P = 32, 32, 16, 8   # small shapes

    world_pts = jax.random.normal(kw, (Nw, 3), dtype=jnp.float32)
    cur_pts = jax.random.normal(kc, (Nc, 3), dtype=jnp.float32)
    world_nrm = jax.random.normal(knw, (Nw, 3), dtype=jnp.float32)
    cur_nrm = jax.random.normal(knc, (Nc, 3), dtype=jnp.float32)

    # Simulate rasterizer misses: some current points / normals are NaN.
    # (Indices chosen so they actually appear in the match table below.)
    nan_rows = jnp.array([4, 10, 22])
    cur_pts = cur_pts.at[nan_rows].set(jnp.nan)
    cur_nrm = cur_nrm.at[nan_rows].set(jnp.nan)

    # Deterministic match table (world index, current index).
    match = jnp.stack(
        [jnp.arange(M, dtype=jnp.int32),
         (jnp.arange(M, dtype=jnp.int32) * 2) % Nc], axis=1)

    # Synthetic renderer intersection points (stand-in for pull_out_mesh).
    inter_pts = 0.5 * jax.random.normal(ki, (P, 3), dtype=jnp.float32)

    # Pose parameters (PyTorch uses float64; TPU path runs float32).
    r_param = jnp.array([[0.10, -0.20, 0.30]], dtype=jnp.float32)
    t_param = jnp.array([[0.05, 0.10, 2.50]], dtype=jnp.float32)

    sum_loss, losses = pose_model_forward(
        r_param, t_param, world_pts, world_nrm,
        cur_pts, cur_nrm, match, inter_pts)
    sum_loss = jax.block_until_ready(sum_loss)

    ref_loss = _reference_forward(
        r_param, t_param, world_pts, world_nrm,
        cur_pts, cur_nrm, match, inter_pts)

    assert jnp.isfinite(sum_loss), "sum_loss is not finite"
    assert jnp.allclose(sum_loss, ref_loss, rtol=1e-3, atol=1e-5), (
        float(sum_loss), float(ref_loss))
    print("KERNEL_OK")
</pallas_src>

<mosaic_0001>
module attributes {stable_mosaic.version = 11 : i64} {
  func.func @_pose_partials_kernel(%arg0: i32, %arg1: i32, %arg2: memref<3x128xf32, #tpu.memory_space<vmem>>, %arg3: memref<3x128xf32, #tpu.memory_space<vmem>>, %arg4: memref<3x128xf32, #tpu.memory_space<vmem>>, %arg5: memref<3x128xf32, #tpu.memory_space<vmem>>, %arg6: memref<8x128xf32, #tpu.memory_space<vmem>>, %arg7: memref<3x128xf32, #tpu.memory_space<vmem>>, %arg8: memref<3x128xf32, #tpu.memory_space<vmem>>, %arg9: memref<1x128xf32, #tpu.memory_space<vmem>>, %arg10: memref<1x128xf32, #tpu.memory_space<vmem>>) attributes {dimension_semantics = [#tpu.dimension_semantics<parallel>, #tpu.dimension_semantics<arbitrary>], iteration_bounds = array<i64: 2, 1>, scalar_prefetch = 0 : i64, scratch_operands = 4 : i64, tpu.core_type = #tpu.core_type<tc>, window_params = [{transform_indices = @transform_0, window_bounds = array<i64: 3, 128>}, {transform_indices = @transform_1, window_bounds = array<i64: 3, 128>}, {transform_indices = @transform_2, window_bounds = array<i64: 3, 128>}, {transform_indices = @transform_3, window_bounds = array<i64: 3, 128>}, {transform_indices = @transform_4, window_bounds = array<i64: 8, 128>}]} {
    %c0_i32 = arith.constant 0 : i32
    %0 = arith.cmpi eq, %arg1, %c0_i32 : i32
    %1 = arith.extui %0 : i1 to i32
    %c0_i32_0 = arith.constant 0 : i32
    %2 = arith.cmpi ne, %1, %c0_i32_0 : i32
    scf.if %2 {
      %cst_36 = arith.constant 0.000000e+00 : f32
      %61 = vector.broadcast %cst_36 : f32 to vector<3x128xf32>
      %c0_37 = arith.constant 0 : index
      %c0_38 = arith.constant 0 : index
      %62 = vector.load %arg7[%c0_37, %c0_38] : memref<3x128xf32, #tpu.memory_space<vmem>>, vector<3x128xf32>
      tpu.vector_store %arg7[%c0_37, %c0_38], %61 {strides = array<i32>} : memref<3x128xf32, #tpu.memory_space<vmem>>, vector<3x128xf32>,
      %cst_39 = arith.constant 0.000000e+00 : f32
      %63 = vector.broadcast %cst_39 : f32 to vector<3x128xf32>
      %c0_40 = arith.constant 0 : index
      %c0_41 = arith.constant 0 : index
      %64 = vector.load %arg8[%c0_40, %c0_41] : memref<3x128xf32, #tpu.memory_space<vmem>>, vector<3x128xf32>
      tpu.vector_store %arg8[%c0_40, %c0_41], %63 {strides = array<i32>} : memref<3x128xf32, #tpu.memory_space<vmem>>, vector<3x128xf32>,
      %cst_42 = arith.constant 0.000000e+00 : f32
      %65 = vector.broadcast %cst_42 : f32 to vector<1x128xf32>
      %c0_43 = arith.constant 0 : index
      %c0_44 = arith.constant 0 : index
      %66 = vector.load %arg9[%c0_43, %c0_44] : memref<1x128xf32, #tpu.memory_space<vmem>>, vector<1x128xf32>
      tpu.vector_store %arg9[%c0_43, %c0_44], %65 {strides = array<i32>} : memref<1x128xf32, #tpu.memory_space<vmem>>, vector<1x128xf32>,
      %cst_45 = arith.constant 0.000000e+00 : f32
      %67 = vector.broadcast %cst_45 : f32 to vector<1x128xf32>
      %c0_46 = arith.constant 0 : index
      %c0_47 = arith.constant 0 : index
      %68 = vector.load %arg10[%c0_46, %c0_47] : memref<1x128xf32, #tpu.memory_space<vmem>>, vector<1x128xf32>
      tpu.vector_store %arg10[%c0_46, %c0_47], %67 {strides = array<i32>} : memref<1x128xf32, #tpu.memory_space<vmem>>, vector<1x128xf32>,
    } else {
    }
    %c0 = arith.constant 0 : index
    %c0_1 = arith.constant 0 : index
    %3 = vector.load %arg2[%c0, %c0_1] : memref<3x128xf32, #tpu.memory_space<vmem>>, vector<3x128xf32>
    %c0_2 = arith.constant 0 : index
    %c0_3 = arith.constant 0 : index
    %4 = vector.load %arg3[%c0_2, %c0_3] : memref<3x128xf32, #tpu.memory_space<vmem>>, vector<3x128xf32>
    %c0_4 = arith.constant 0 : index
    %c0_5 = arith.constant 0 : index
    %5 = vector.load %arg4[%c0_4, %c0_5] : memref<3x128xf32, #tpu.memory_space<vmem>>, vector<3x128xf32>
    %c0_6 = arith.constant 0 : index
    %c0_7 = arith.constant 0 : index
    %6 = vector.load %arg5[%c0_6, %c0_7] : memref<3x128xf32, #tpu.memory_space<vmem>>, vector<3x128xf32>
    %7 = vector.extract_strided_slice %4 {offsets = [0, 0], sizes = [1, 128], strides = [1, 1]} : vector<3x128xf32> to vector<1x128xf32>
    %8 = arith.cmpf one, %7, %7 : vector<1x128xf32>
    %cst = arith.constant dense<true> : vector<1x128xi1>
    %9 = arith.xori %8, %cst : vector<1x128xi1>
    %10 = arith.subf %3, %4 : vector<3x128xf32>
    %11 = arith.mulf %10, %10 : vector<3x128xf32>
    %12 = arith.cmpf one, %11, %11 : vector<3x128xf32>
    %cst_8 = arith.constant dense<true> : vector<3x128xi1>
    %13 = arith.xori %12, %cst_8 : vector<3x128xi1>
    %14 = vector.broadcast %9 : vector<1x128xi1> to vector<3x128xi1>
    %15 = arith.andi %14, %13 : vector<3x128xi1>
    %c0_9 = arith.constant 0 : index
    %c0_10 = arith.constant 0 : index
    %16 = vector.load %arg7[%c0_9, %c0_10] : memref<3x128xf32, #tpu.memory_space<vmem>>, vector<3x128xf32>
    %cst_11 = arith.constant 0.000000e+00 : f32
    %17 = vector.broadcast %cst_11 : f32 to vector<3x128xf32>
    %18 = arith.select %15, %11, %17 : vector<3x128xi1>, vector<3x128xf32>
    %19 = arith.addf %16, %18 : vector<3x128xf32>
    %c0_12 = arith.constant 0 : index
    %c0_13 = arith.constant 0 : index
    %20 = vector.load %arg7[%c0_12, %c0_13] : memref<3x128xf32, #tpu.memory_space<vmem>>, vector<3x128xf32>
    tpu.vector_store %arg7[%c0_12, %c0_13], %19 {strides = array<i32>} : memref<3x128xf32, #tpu.memory_space<vmem>>, vector<3x128xf32>,
    %c0_14 = arith.constant 0 : index
    %c0_15 = arith.constant 0 : index
    %21 = vector.load %arg8[%c0_14, %c0_15] : memref<3x128xf32, #tpu.memory_space<vmem>>, vector<3x128xf32>
    %22 = arith.extui %15 : vector<3x128xi1> to vector<3x128xi32>
    %23 = arith.sitofp %22 : vector<3x128xi32> to vector<3x128xf32>
    %24 = arith.addf %21, %23 : vector<3x128xf32>
    %c0_16 = arith.constant 0 : index
    %c0_17 = arith.constant 0 : index
    %25 = vector.load %arg8[%c0_16, %c0_17] : memref<3x128xf32, #tpu.memory_space<vmem>>, vector<3x128xf32>
    tpu.vector_store %arg8[%c0_16, %c0_17], %24 {strides = array<i32>} : memref<3x128xf32, #tpu.memory_space<vmem>>, vector<3x128xf32>,
    %26 = arith.mulf %5, %6 : vector<3x128xf32>
    %cst_18 = arith.constant dense<0.000000e+00> : vector<128xf32>
    %27 = vector.multi_reduction <add>, %26, %cst_18 [0] : vector<3x128xf32> to vector<128xf32>
    %28 = vector.shape_cast %27 : vector<128xf32> to vector<1x128xf32>
    %29 = arith.mulf %5, %5 : vector<3x128xf32>
    %cst_19 = arith.constant dense<0.000000e+00> : vector<128xf32>
    %30 = vector.multi_reduction <add>, %29, %cst_19 [0] : vector<3x128xf32> to vector<128xf32>
    %31 = vector.shape_cast %30 : vector<128xf32> to vector<1x128xf32>
    %32 = arith.mulf %6, %6 : vector<3x128xf32>
    %cst_20 = arith.constant dense<0.000000e+00> : vector<128xf32>
    %33 = vector.multi_reduction <add>, %32, %cst_20 [0] : vector<3x128xf32> to vector<128xf32>
    %34 = vector.shape_cast %33 : vector<128xf32> to vector<1x128xf32>
    %cst_21 = arith.constant 1.000000e-16 : f32
    %35 = vector.broadcast %cst_21 : f32 to vector<1x128xf32>
    %36 = arith.maximumf %31, %35 : vector<1x128xf32>
    %37 = math.rsqrt %36 : vector<1x128xf32>
    %cst_22 = arith.constant 1.000000e-16 : f32
    %38 = vector.broadcast %cst_22 : f32 to vector<1x128xf32>
    %39 = arith.maximumf %34, %38 : vector<1x128xf32>
    %40 = math.rsqrt %39 : vector<1x128xf32>
    %41 = arith.mulf %37, %40 : vector<1x128xf32>
    %42 = arith.mulf %28, %41 : vector<1x128xf32>
    %cst_23 = arith.constant 1.000000e+00 : f32
    %43 = vector.broadcast %cst_23 : f32 to vector<1x128xf32>
    %44 = arith.subf %43, %42 : vector<1x128xf32>
    %45 = arith.cmpf one, %44, %44 : vector<1x128xf32>
    %cst_24 = arith.constant dense<true> : vector<1x128xi1>
    %46 = arith.xori %45, %cst_24 : vector<1x128xi1>
    %47 = arith.andi %9, %46 : vector<1x128xi1>
    %c0_25 = arith.constant 0 : index
    %c0_26 = arith.constant 0 : index
    %48 = vector.load %arg9[%c0_25, %c0_26] : memref<1x128xf32, #tpu.memory_space<vmem>>, vector<1x128xf32>
    %cst_27 = arith.constant 0.000000e+00 : f32
    %49 = vector.broadcast %cst_27 : f32 to vector<1x128xf32>
    %50 = arith.select %47, %44, %49 : vector<1x128xi1>, vector<1x128xf32>
    %51 = arith.addf %48, %50 : vector<1x128xf32>
    %c0_28 = arith.constant 0 : index
    %c0_29 = arith.constant 0 : index
    %52 = vector.load %arg9[%c0_28, %c0_29] : memref<1x128xf32, #tpu.memory_space<vmem>>, vector<1x128xf32>
    tpu.vector_store %arg9[%c0_28, %c0_29], %51 {strides = array<i32>} : memref<1x128xf32, #tpu.memory_space<vmem>>, vector<1x128xf32>,
    %c0_30 = arith.constant 0 : index
    %c0_31 = arith.constant 0 : index
    %53 = vector.load %arg10[%c0_30, %c0_31] : memref<1x128xf32, #tpu.memory_space<vmem>>, vector<1x128xf32>
    %54 = arith.extui %47 : vector<1x128xi1> to vector<1x128xi32>
    %55 = arith.sitofp %54 : vector<1x128xi32> to vector<1x128xf32>
    %56 = arith.addf %53, %55 : vector<1x128xf32>
    %c0_32 = arith.constant 0 : index
    %c0_33 = arith.constant 0 : index
    %57 = vector.load %arg10[%c0_32, %c0_33] : memref<1x128xf32, #tpu.memory_space<vmem>>, vector<1x128xf32>
    tpu.vector_store %arg10[%c0_32, %c0_33], %56 {strides = array<i32>} : memref<1x128xf32, #tpu.memory_space<vmem>>, vector<1x128xf32>,
    %c0_i32_34 = arith.constant 0 : i32
    %58 = arith.cmpi eq, %arg1, %c0_i32_34 : i32
    %59 = arith.extui %58 : i1 to i32
    %c0_i32_35 = arith.constant 0 : i32
    %60 = arith.cmpi ne, %59, %c0_i32_35 : i32
    scf.if %60 {
      %c0_36 = arith.constant 0 : index
      %c0_37 = arith.constant 0 : index
      %61 = vector.load %arg7[%c0_36, %c0_37] : memref<3x128xf32, #tpu.memory_space<vmem>>, vector<3x128xf32>
      %62 = vector.shape_cast %61 : vector<3x128xf32> to vector<1x3x128xf32>
      %cst_38 = arith.constant dense<0.000000e+00> : vector<1xf32>
      %63 = vector.multi_reduction <add>, %62, %cst_38 [1, 2] : vector<1x3x128xf32> to vector<1xf32>
      %64 = vector.shape_cast %63 : vector<1xf32> to vector<1x1x1xf32>
      %65 = vector.extract %64[0, 0, 0] : f32 from vector<1x1x1xf32>
      %66 = vector.broadcast %65 : f32 to vector<1x1xf32>
      %c0_39 = arith.constant 0 : index
      %c0_40 = arith.constant 0 : index
      %67 = vector.load %arg8[%c0_39, %c0_40] : memref<3x128xf32, #tpu.memory_space<vmem>>, vector<3x128xf32>
      %68 = vector.shape_cast %67 : vector<3x128xf32> to vector<1x3x128xf32>
      %cst_41 = arith.constant dense<0.000000e+00> : vector<1xf32>
      %69 = vector.multi_reduction <add>, %68, %cst_41 [1, 2] : vector<1x3x128xf32> to vector<1xf32>
      %70 = vector.shape_cast %69 : vector<1xf32> to vector<1x1x1xf32>
      %71 = vector.extract %70[0, 0, 0] : f32 from vector<1x1x1xf32>
      %72 = vector.broadcast %71 : f32 to vector<1x1xf32>
      %c0_42 = arith.constant 0 : index
      %c0_43 = arith.constant 0 : index
      %73 = vector.load %arg9[%c0_42, %c0_43] : memref<1x128xf32, #tpu.memory_space<vmem>>, vector<1x128xf32>
      %74 = vector.shape_cast %73 : vector<1x128xf32> to vector<1x1x128xf32>
      %cst_44 = arith.constant dense<0.000000e+00> : vector<1xf32>
      %75 = vector.multi_reduction <add>, %74, %cst_44 [1, 2] : vector<1x1x128xf32> to vector<1xf32>
      %76 = vector.shape_cast %75 : vector<1xf32> to vector<1x1x1xf32>
      %77 = vector.extract %76[0, 0, 0] : f32 from vector<1x1x1xf32>
      %78 = vector.broadcast %77 : f32 to vector<1x1xf32>
      %c0_45 = arith.constant 0 : index
      %c0_46 = arith.constant 0 : index
      %79 = vector.load %arg10[%c0_45, %c0_46] : memref<1x128xf32, #tpu.memory_space<vmem>>, vector<1x128xf32>
      %80 = vector.shape_cast %79 : vector<1x128xf32> to vector<1x1x128xf32>
      %cst_47 = arith.constant dense<0.000000e+00> : vector<1xf32>
      %81 = vector.multi_reduction <add>, %80, %cst_47 [1, 2] : vector<1x1x128xf32> to vector<1xf32>
      %82 = vector.shape_cast %81 : vector<1xf32> to vector<1x1x1xf32>
      %83 = vector.extract %82[0, 0, 0] : f32 from vector<1x1x1xf32>
      %84 = vector.broadcast %83 : f32 to vector<1x1xf32>
      %85 = tpu.concatenate %66, %72, %78, %84 in 1 : vector<1x1xf32>, vector<1x1xf32>, vector<1x1xf32>, vector<1x1xf32> -> vector<1x4xf32>
      %cst_48 = arith.constant 0.000000e+00 : f32
      %86 = vector.broadcast %cst_48 : f32 to vector<8x128xf32>
      %c0_49 = arith.constant 0 : index
      %c0_50 = arith.constant 0 : index
      %87 = vector.load %arg6[%c0_49, %c0_50] : memref<8x128xf32, #tpu.memory_space<vmem>>, vector<8x128xf32>
      tpu.vector_store %arg6[%c0_49, %c0_50], %86 {strides = array<i32>} : memref<8x128xf32, #tpu.memory_space<vmem>>, vector<8x128xf32>,
      %c0_51 = arith.constant 0 : index
      %c0_52 = arith.constant 0 : index
      %88 = vector.load %arg6[%c0_51, %c0_52] : memref<8x128xf32, #tpu.memory_space<vmem>>, vector<1x4xf32>
      tpu.vector_store %arg6[%c0_51, %c0_52], %85 {strides = array<i32>} : memref<8x128xf32, #tpu.memory_space<vmem>>, vector<1x4xf32>,
    } else {
    }
    return
  }
  func.func @transform_0(%arg0: i32, %arg1: i32) -> (i32, i32) {
    %c1_i32 = arith.constant 1 : i32
    %0 = arith.muli %arg0, %c1_i32 : i32
    %1 = arith.addi %0, %arg1 : i32
    %c0_i32 = arith.constant 0 : i32
    %c0_i32_0 = arith.constant 0 : i32
    return %c0_i32, %1 : i32, i32
  }
  func.func @transform_1(%arg0: i32, %arg1: i32) -> (i32, i32) {
    %c1_i32 = arith.constant 1 : i32
    %0 = arith.muli %arg0, %c1_i32 : i32
    %1 = arith.addi %0, %arg1 : i32
    %c0_i32 = arith.constant 0 : i32
    %c0_i32_0 = arith.constant 0 : i32
    return %c0_i32, %1 : i32, i32
  }
  func.func @transform_2(%arg0: i32, %arg1: i32) -> (i32, i32) {
    %c1_i32 = arith.constant 1 : i32
    %0 = arith.muli %arg0, %c1_i32 : i32
    %1 = arith.addi %0, %arg1 : i32
    %c0_i32 = arith.constant 0 : i32
    %c0_i32_0 = arith.constant 0 : i32
    return %c0_i32, %1 : i32, i32
  }
  func.func @transform_3(%arg0: i32, %arg1: i32) -> (i32, i32) {
    %c1_i32 = arith.constant 1 : i32
    %0 = arith.muli %arg0, %c1_i32 : i32
    %1 = arith.addi %0, %arg1 : i32
    %c0_i32 = arith.constant 0 : i32
    %c0_i32_0 = arith.constant 0 : i32
    return %c0_i32, %1 : i32, i32
  }
  func.func @transform_4(%arg0: i32, %arg1: i32) -> (i32, i32) {
    %c0_i32 = arith.constant 0 : i32
    %c0_i32_0 = arith.constant 0 : i32
    return %arg0, %c0_i32 : i32, i32
  }
}

</mosaic_0001>

<llo_original>
// kernel: pose_model_forward.1
$region0: #{pose_model_forward.1}
  #allocation0 [shape = 'u32[]', space=smem, size = 0x4, offset = 0x4, fixed_abs, tag = 'smem constant byte address 0x4 - core index']
  #allocation1 [shape = 'u32[144,128]{1,0:T(1,128)}', space=vmem, size = 0x12000, scoped, tag = 'internal scratch']
  #allocation2 [shape = 'f32[3,128]{1,0:T(4,128)}', space=vmem, size = 0x800, scoped, tag = 'scratch operand']
  #allocation3 [shape = 'f32[3,128]{1,0:T(4,128)}', space=vmem, size = 0x800, scoped, tag = 'scratch operand']
  #allocation4 [shape = 'f32[1,128]{1,0:T(1,128)}', space=vmem, size = 0x200, scoped, tag = 'scratch operand']
  #allocation5 [shape = 'f32[1,128]{1,0:T(1,128)}', space=vmem, size = 0x200, scoped, tag = 'scratch operand']
  %s0 = inlined_call_operand.vmem [shape: f32[3,256], index: 0, kind: input, shape index: {}]
  %s1 = inlined_call_operand.vmem [shape: f32[3,256], index: 1, kind: input, shape index: {}]
  %s2 = inlined_call_operand.vmem [shape: f32[3,256], index: 2, kind: input, shape index: {}]
  %s3 = inlined_call_operand.vmem [shape: f32[3,256], index: 3, kind: input, shape index: {}]
  %s4 = inlined_call_operand.vmem [shape: f32[16,128], index: 4, kind: output, shape index: {}]
  %s5 = sld [smem:[#allocation0]]
  $region57: #{pose_model_forward.1} parent=0
    _
  %s7 = ssub.s32 1, %s5
  %s8 = scalar_select 0, %s7, %s5
  loop: start=0, step=1, limit=4
  $region2: #{pose_model_forward.1} parent=0 // loop_pre_header
    _
  $region3: #{pose_model_forward.1} parent=0 // loop_header
    %s10 = sphi 0, %s14
    %p11 = scmp.ge.s32.totalorder %s10, 4
    %s17 = sphi 0, %s29
    %s18 = sphi 0, %s25
    %s19 = sphi 0, %s17
    %s20 = sphi 0, %s18
    %s21 = sphi 0, %s19
    %s22 = sphi 0, %s20
    %s34 = sphi 0, %s36
    %s37 = sphi 0, %s34
    %s38 = sphi 0, %s37
    %s54 = sphi 0, %s38
    %s62 = sphi 0, %s64
    %s65 = sphi 0, %s62
    %s66 = sphi 0, %s65
    %s82 = sphi 0, %s66
    %s90 = sphi 0, %s92
    %s93 = sphi 0, %s90
    %s94 = sphi 0, %s93
    %s110 = sphi 0, %s94
    %s118 = sphi 0, %s120
    %s121 = sphi 0, %s118
    %s122 = sphi 0, %s121
    %s138 = sphi 0, %s122
    %s144 = sphi 0, %s146
    %s147 = sphi 0, %s144
    %s148 = sphi 0, %s147
    %s164 = sphi 0, %s148
  $region4: #{pose_model_forward.1} parent=0 // loop_header_branch
    %13 = sbr.rel (%p11) target = $region8
  $region5: #{pose_model_forward.1} parent=0 // loop_body
    %s15 = ssub.s32 %s10, 1
    %s16 = ssub.s32 %s10, 2
    %s23 = sadd.s32 1, %s18
    %p24 = scmp.ge.s32.totalorder %s23, 1
    %s25 = scalar_select %p24, 0, %s23
    %s26 = sadd.s32 1, %s17
    %s27 = scalar_select %p24, %s26, %s17
    %p28 = scmp.ge.s32.totalorder %s27, 2
    %s29 = scalar_select %p28, 0, %s27
    %s30 = sadd.s32 %s17, %s18
    %s31 = sadd.s32 %s29, %s25
    %s32 = ssub.s32 %s30, %s31
    %p33 = scmp.eq.s32.totalorder %s32, 0
    %s35 = sadd.s32 %s34, 1
    %s36 = scalar_select %p33, %s34, %s35
    %p39 = pneg %p33
    %p40 = scmp.eq.s32.totalorder %s10, 1
    %p41 = por %p39, %p40
    %p42 = scmp.ne.s32.totalorder %s34, %s37
    %p43 = scmp.eq.s32.totalorder %s10, 0
    %p44 = por %p42, %p43
    %p45 = scmp.ne.s32.totalorder %s34, %s37
    %p46 = scmp.eq.s32.totalorder %s15, 1
    %p47 = por %p45, %p46
    %p48 = scmp.ne.s32.totalorder %s37, %s38
    %p49 = scmp.eq.s32.totalorder %s15, 0
    %p50 = por %p48, %p49
    %p51 = scmp.ne.s32.totalorder %s37, %s38
    %p52 = scmp.eq.s32.totalorder %s16, 1
    %p53 = por %p51, %p52
    %p55 = scmp.ne.s32.totalorder %s38, %s54
    %p56 = scmp.eq.s32.totalorder %s16, 0
    %p57 = por %p55, %p56
    %s58 = sadd.s32 %s17, %s18
    %s59 = sadd.s32 %s29, %s25
    %s60 = ssub.s32 %s58, %s59
    %p61 = scmp.eq.s32.totalorder %s60, 0
    %s63 = sadd.s32 %s62, 1
    %s64 = scalar_select %p61, %s62, %s63
    %p67 = pneg %p61
    %p68 = scmp.eq.s32.totalorder %s10, 1
    %p69 = por %p67, %p68
    %p70 = scmp.ne.s32.totalorder %s62, %s65
    %p71 = scmp.eq.s32.totalorder %s10, 0
    %p72 = por %p70, %p71
    %p73 = scmp.ne.s32.totalorder %s62, %s65
    %p74 = scmp.eq.s32.totalorder %s15, 1
    %p75 = por %p73, %p74
    %p76 = scmp.ne.s32.totalorder %s65, %s66
    %p77 = scmp.eq.s32.totalorder %s15, 0
    %p78 = por %p76, %p77
    %p79 = scmp.ne.s32.totalorder %s65, %s66
    %p80 = scmp.eq.s32.totalorder %s16, 1
    %p81 = por %p79, %p80
    %p83 = scmp.ne.s32.totalorder %s66, %s82
    %p84 = scmp.eq.s32.totalorder %s16, 0
    %p85 = por %p83, %p84
    %s86 = sadd.s32 %s17, %s18
    %s87 = sadd.s32 %s29, %s25
    %s88 = ssub.s32 %s86, %s87
    %p89 = scmp.eq.s32.totalorder %s88, 0
    %s91 = sadd.s32 %s90, 1
    %s92 = scalar_select %p89, %s90, %s91
    %p95 = pneg %p89
    %p96 = scmp.eq.s32.totalorder %s10, 1
    %p97 = por %p95, %p96
    %p98 = scmp.ne.s32.totalorder %s90, %s93
    %p99 = scmp.eq.s32.totalorder %s10, 0
    %p100 = por %p98, %p99
    %p101 = scmp.ne.s32.totalorder %s90, %s93
    %p102 = scmp.eq.s32.totalorder %s15, 1
    %p103 = por %p101, %p102
    %p104 = scmp.ne.s32.totalorder %s93, %s94
    %p105 = scmp.eq.s32.totalorder %s15, 0
    %p106 = por %p104, %p105
    %p107 = scmp.ne.s32.totalorder %s93, %s94
    %p108 = scmp.eq.s32.totalorder %s16, 1
    %p109 = por %p107, %p108
    %p111 = scmp.ne.s32.totalorder %s94, %s110
    %p112 = scmp.eq.s32.totalorder %s16, 0
    %p113 = por %p111, %p112
    %s114 = sadd.s32 %s17, %s18
    %s115 = sadd.s32 %s29, %s25
    %s116 = ssub.s32 %s114, %s115
    %p117 = scmp.eq.s32.totalorder %s116, 0
    %s119 = sadd.s32 %s118, 1
    %s120 = scalar_select %p117, %s118, %s119
    %p123 = pneg %p117
    %p124 = scmp.eq.s32.totalorder %s10, 1
    %p125 = por %p123, %p124
    %p126 = scmp.ne.s32.totalorder %s118, %s121
    %p127 = scmp.eq.s32.totalorder %s10, 0
    %p128 = por %p126, %p127
    %p129 = scmp.ne.s32.totalorder %s118, %s121
    %p130 = scmp.eq.s32.totalorder %s15, 1
    %p131 = por %p129, %p130
    %p132 = scmp.ne.s32.totalorder %s121, %s122
    %p133 = scmp.eq.s32.totalorder %s15, 0
    %p134 = por %p132, %p133
    %p135 = scmp.ne.s32.totalorder %s121, %s122
    %p136 = scmp.eq.s32.totalorder %s16, 1
    %p137 = por %p135, %p136
    %p139 = scmp.ne.s32.totalorder %s122, %s138
    %p140 = scmp.eq.s32.totalorder %s16, 0
    %p141 = por %p139, %p140
    %s142 = ssub.s32 %s17, %s29
    %p143 = scmp.eq.s32.totalorder %s142, 0
    %s145 = sadd.s32 %s144, 1
    %s146 = scalar_select %p143, %s144, %s145
    %p149 = pneg %p143
    %p150 = scmp.eq.s32.totalorder %s10, 1
    %p151 = por %p149, %p150
    %p152 = scmp.ne.s32.totalorder %s144, %s147
    %p153 = scmp.eq.s32.totalorder %s10, 0
    %p154 = por %p152, %p153
    %p155 = scmp.ne.s32.totalorder %s144, %s147
    %p156 = scmp.eq.s32.totalorder %s15, 1
    %p157 = por %p155, %p156
    %p158 = scmp.ne.s32.totalorder %s147, %s148
    %p159 = scmp.eq.s32.totalorder %s15, 0
    %p160 = por %p158, %p159
    %p161 = scmp.ne.s32.totalorder %s147, %s148
    %p162 = scmp.eq.s32.totalorder %s16, 1
    %p163 = por %p161, %p162
    %p165 = scmp.ne.s32.totalorder %s148, %s164
    %p166 = scmp.eq.s32.totalorder %s16, 0
    %p167 = por %p165, %p166
    %p168 = scmp.le.s32.totalorder 1, %s10
    %p169 = scmp.lt.s32.totalorder %s10, 3
    %p170 = pnand %p168, %p169
    %p171 = pneg %p170
    // Predicated region
    $region9: #{pose_model_forward.1} parent=5 // pred_check
      _
    $region10: #{pose_model_forward.1} parent=5 // pred_check_branch
      %173 = sbr.rel (%p170) target = $region12
    $region11: #{pose_model_forward.1} parent=5 // pred_region
      %s174 = ssub.s32 %s10, 1
    $region12: #{pose_model_forward.1} parent=5 // pred_fallthru
      _
    %p175 = scmp.lt.s32.totalorder %s10, 2
    // Predicated region
    $region13: #{pose_model_forward.1} parent=5 // pred_check
      %p176 = pneg %p175
    $region14: #{pose_model_forward.1} parent=5 // pred_check_branch
      %178 = sbr.rel (%p176) target = $region16
    $region15: #{pose_model_forward.1} parent=5 // pred_region
      // Predicated region
      $region17: #{pose_model_forward.1} parent=15 // pred_check
        %p179 = pneg %p44
      $region18: #{pose_model_forward.1} parent=15 // pred_check_branch
        %181 = sbr.rel (%p179) target = $region20
      $region19: #{pose_model_forward.1} parent=15 // pred_region
        %s182 = sadd.s32 %s17, %s18
        %p183 = scmp.lt.s32.totalorder %s182, 1
        %s184 = scalar_select %p183, %s182, 1
        %s185 = smul.addr %s184, 4
        %s186 = scalar_lea.vmem %s0, %s185
        %s187 = sadd.s32 %s17, %s18
      $region20: #{pose_model_forward.1} parent=15 // pred_fallthru
        _
      // Predicated region
      $region21: #{pose_model_forward.1} parent=15 // pred_check
        %p188 = pneg %p72
      $region22: #{pose_model_forward.1} parent=15 // pred_check_branch
        %190 = sbr.rel (%p188) target = $region24
      $region23: #{pose_model_forward.1} parent=15 // pred_region
        %s191 = sadd.s32 %s17, %s18
        %p192 = scmp.lt.s32.totalorder %s191, 1
        %s193 = scalar_select %p192, %s191, 1
        %s194 = smul.addr %s193, 4
        %s195 = scalar_lea.vmem %s1, %s194
        %s196 = sadd.s32 %s17, %s18
      $region24: #{pose_model_forward.1} parent=15 // pred_fallthru
        _
      // Predicated region
      $region25: #{pose_model_forward.1} parent=15 // pred_check
        %p197 = pneg %p100
      $region26: #{pose_model_forward.1} parent=15 // pred_check_branch
        %199 = sbr.rel (%p197) target = $region28
      $region27: #{pose_model_forward.1} parent=15 // pred_region
        %s200 = sadd.s32 %s17, %s18
        %p201 = scmp.lt.s32.totalorder %s200, 1
        %s202 = scalar_select %p201, %s200, 1
        %s203 = smul.addr %s202, 4
        %s204 = scalar_lea.vmem %s2, %s203
        %s205 = sadd.s32 %s17, %s18
      $region28: #{pose_model_forward.1} parent=15 // pred_fallthru
        _
      // Predicated region
      $region29: #{pose_model_forward.1} parent=15 // pred_check
        %p206 = pneg %p128
      $region30: #{pose_model_forward.1} parent=15 // pred_check_branch
        %208 = sbr.rel (%p206) target = $region32
      $region31: #{pose_model_forward.1} parent=15 // pred_region
        %s209 = sadd.s32 %s17, %s18
        %p210 = scmp.lt.s32.totalorder %s209, 1
        %s211 = scalar_select %p210, %s209, 1
        %s212 = smul.addr %s211, 4
        %s213 = scalar_lea.vmem %s3, %s212
        %s214 = sadd.s32 %s17, %s18
      $region32: #{pose_model_forward.1} parent=15 // pred_fallthru
        _
    $region16: #{pose_model_forward.1} parent=5 // pred_fallthru
      _
    %p215 = scmp.le.s32.totalorder 1, %s10
    %p216 = scmp.lt.s32.totalorder %s10, 3
    %p217 = pnand %p215, %p216
    %p218 = pneg %p217
    // Predicated region
    $region33: #{pose_model_forward.1} parent=5 // pred_check
      _
    $region34: #{pose_model_forward.1} parent=5 // pred_check_branch
      %220 = sbr.rel (%p217) target = $region36
    $region35: #{pose_model_forward.1} parent=5 // pred_region
      %s221 = ssub.s32 %s10, 1
      %s222 = sadd.s32 %s19, %s20
      %p223 = scmp.lt.s32.totalorder %s222, 1
      %s224 = scalar_select %p223, %s222, 1
      %s225 = smul.addr %s224, 4
      %s226 = scalar_lea.vmem %s0, %s225
      %p227 = pneg %p50
      %p228 = pneg %p47
      %s229 = sadd.s32 %s19, %s20
      %p230 = scmp.lt.s32.totalorder %s229, 1
      %s231 = scalar_select %p230, %s229, 1
      %s232 = smul.addr %s231, 4
      %s233 = scalar_lea.vmem %s1, %s232
      %p234 = pneg %p78
      %p235 = pneg %p75
      %s236 = sadd.s32 %s19, %s20
      %p237 = scmp.lt.s32.totalorder %s236, 1
      %s238 = scalar_select %p237, %s236, 1
      %s239 = smul.addr %s238, 4
      %s240 = scalar_lea.vmem %s2, %s239
      %p241 = pneg %p106
      %p242 = pneg %p103
      %s243 = sadd.s32 %s19, %s20
      %p244 = scmp.lt.s32.totalorder %s243, 1
      %s245 = scalar_select %p244, %s243, 1
      %s246 = smul.addr %s245, 4
      %s247 = scalar_lea.vmem %s3, %s246
      %p248 = pneg %p134
      %p249 = pneg %p131
      %p250 = pneg %p160
      %p251 = pneg %p157
      %p252 = scmp.lt.s32.totalorder %s19, 1
      %s253 = scalar_select %p252, %s19, 1
      %s254 = smul.addr %s253, 8
      %s255 = scalar_lea.vmem %s4, %s254
      %s256 = sadd.s32 %s19, %s20
      %p257 = scmp.lt.s32.totalorder %s256, 1
      %s258 = scalar_select %p257, %s256, 1
      %s259 = smul.addr %s258, 4
      %s260 = scalar_lea.vmem %s0, %s259
      %s261 = sadd.s32 %s19, %s20
      %s262 = sadd.s32 %s19, %s20
      %p263 = scmp.lt.s32.totalorder %s262, 1
      %s264 = scalar_select %p263, %s262, 1
      %s265 = smul.addr %s264, 4
      %s266 = scalar_lea.vmem %s1, %s265
      %s267 = sadd.s32 %s19, %s20
      %s268 = sadd.s32 %s19, %s20
      %p269 = scmp.lt.s32.totalorder %s268, 1
      %s270 = scalar_select %p269, %s268, 1
      %s271 = smul.addr %s270, 4
      %s272 = scalar_lea.vmem %s2, %s271
      %s273 = sadd.s32 %s19, %s20
      %s274 = sadd.s32 %s19, %s20
      %p275 = scmp.lt.s32.totalorder %s274, 1
      %s276 = scalar_select %p275, %s274, 1
      %s277 = smul.addr %s276, 4
      %s278 = scalar_lea.vmem %s3, %s277
      %s279 = sadd.s32 %s19, %s20
      %p280 = scmp.lt.s32.totalorder %s19, 1
      %s281 = scalar_select %p280, %s19, 1
      %s282 = smul.addr %s281, 8
      %s283 = scalar_lea.vmem %s4, %s282
      %p284 = scmp.eq.s32.totalorder %s20, 0
      // Predicated region
      $region37: #{pose_model_forward.1} parent=35 // pred_check
        %p285 = pneg %p284
      $region38: #{pose_model_forward.1} parent=35 // pred_check_branch
        %287 = sbr.rel (%p285) target = $region40
      $region39: #{pose_model_forward.1} parent=35 // pred_region
        %288 = vst [vmem:[#allocation2] sm:$0x7] 0.0
        %289 = vst [vmem:[#allocation3] sm:$0x7] 0.0
        %290 = vst [vmem:[#allocation4] sm:$0x1] 0.0
        %291 = vst [vmem:[#allocation5] sm:$0x1] 0.0
      $region40: #{pose_model_forward.1} parent=35 // pred_fallthru
        _
      %v292 = vld [vmem:[%s260] sm:$0x7]
      %v293 = vld [vmem:[%s266] sm:$0x7]
      %v294 = vld [vmem:[%s272] sm:$0x7]
      %v295 = vld [vmem:[%s278] sm:$0x7]
      %vm296 = vcmp.ne.f32.partialorder %v293, %v293
      %vm297 = vmxor %vm296, 1
      %v298 = vsub.f32 %v292, %v293
      %v299 = vmul.f32 %v298, %v298
      %vm300 = vcmp.ne.f32.partialorder %v299, %v299
      %vm301 = vmxor %vm300, 1
      %v302 = vsel %vm297, 1, 0
      %v303 = vlaneseq
      %v304 = vshrl.u32 %v303, 7
      %v305 = vsub.s32 0, %v304
      %v306 = vrot.slane %v302, %v305
      %vm307 = vcmp.eq.s32.totalorder %v306, 1
      %vm308 = vmand %vm307, %vm301
      %v309 = vld [vmem:[#allocation2] sm:$0x7]
      %v310 = vsel %vm308, %v299, 0.0
      %v311 = vadd.f32 %v309, %v310
      %312 = vst [vmem:[#allocation2] sm:$0x7] %v311
      %v313 = vld [vmem:[#allocation3] sm:$0x7]
      %v314 = vsel %vm308, 1, 0
      %v315 = vcvt.s32.f32 %v314
      %v316 = vadd.f32 %v313, %v315
      %317 = vst [vmem:[#allocation3] sm:$0x7] %v316
      %v318 = vmul.f32 %v294, %v295
      %vm319 = vcmask 1042432
      %v320 = vsel %vm319, %v318, 0.0
      %v321 = vrot.slane %v320, 4
      %v322 = vadd.f32 %v320, %v321
      %v323 = vrot.slane %v322, 2
      %v324 = vadd.f32 %v322, %v323
      %v325 = vrot.slane %v324, 1
      %v326 = vadd.f32 %v324, %v325
      %v327 = vmul.f32 %v294, %v294
      %v328 = vsel %vm319, %v327, 0.0
      %v329 = vrot.slane %v328, 4
      %v330 = vadd.f32 %v328, %v329
      %v331 = vrot.slane %v330, 2
      %v332 = vadd.f32 %v330, %v331
      %v333 = vrot.slane %v332, 1
      %v334 = vadd.f32 %v332, %v333
      %v335 = vmul.f32 %v295, %v295
      %v336 = vsel %vm319, %v335, 0.0
      %v337 = vrot.slane %v336, 4
      %v338 = vadd.f32 %v336, %v337
      %v339 = vrot.slane %v338, 2
      %v340 = vadd.f32 %v338, %v339
      %v341 = vrot.slane %v340, 1
      %v342 = vadd.f32 %v340, %v341
      %v343 = vmax.f32 %v334, 1e-16
      %v344 = vrsqrt.pop %v343
      %v345 = vmax.f32 %v342, 1e-16
      %v346 = vrsqrt.pop %v345
      %v347 = vmul.f32 %v344, %v346
      %v348 = vmul.f32 %v326, %v347
      %v349 = vsub.f32 1.0, %v348
      %vm350 = vcmp.ne.f32.partialorder %v349, %v349
      %vm351 = vmxor %vm350, 1
      %vm352 = vmand %vm297, %vm351
      %v353 = vld [vmem:[#allocation4] sm:$0x1]
      %v354 = vsel %vm352, %v349, 0.0
      %v355 = vadd.f32 %v353, %v354
      %356 = vst [vmem:[#allocation4] sm:$0x1] %v355
      %v357 = vld [vmem:[#allocation5] sm:$0x1]
      %v358 = vsel %vm352, 1, 0
      %v359 = vcvt.s32.f32 %v358
      %v360 = vadd.f32 %v357, %v359
      %361 = vst [vmem:[#allocation5] sm:$0x1] %v360
      // Predicated region
      $region41: #{pose_model_forward.1} parent=35 // pred_check
        %p362 = pneg %p284
      $region42: #{pose_model_forward.1} parent=35 // pred_check_branch
        %364 = sbr.rel (%p362) target = $region44
      $region43: #{pose_model_forward.1} parent=35 // pred_region
        %v365 = vld [vmem:[#allocation2] sm:$0x7]
        %v366 = vsel %vm319, %v365, 0.0
        %367 = vadd.xlane.f32.xlu0 %v366
        %v368 = vpop.xlane.xlu0 %367
        %v369 = vrot.slane %v368, 4
        %v370 = vadd.f32 %v368, %v369
        %v371 = vrot.slane %v370, 2
        %v372 = vadd.f32 %v370, %v371
        %v373 = vrot.slane %v372, 1
        %v374 = vadd.f32 %v372, %v373
        %s375 = vtos %v374
        %v376 = vstv %s375
        %v377 = vld [vmem:[#allocation3] sm:$0x7]
        %v378 = vsel %vm319, %v377, 0.0
        %379 = vadd.xlane.f32.xlu0 %v378
        %v380 = vpop.xlane.xlu0 %379
        %v381 = vrot.slane %v380, 4
        %v382 = vadd.f32 %v380, %v381
        %v383 = vrot.slane %v382, 2
        %v384 = vadd.f32 %v382, %v383
        %v385 = vrot.slane %v384, 1
        %v386 = vadd.f32 %v384, %v385
        %s387 = vtos %v386
        %v388 = vstv %s387
        %v389 = vld [vmem:[#allocation4] sm:$0x1]
        %vm390 = vcmask 1040384
        %v391 = vsel %vm390, %v389, 0.0
        %392 = vadd.xlane.f32.xlu0 %v391
        %v393 = vpop.xlane.xlu0 %392
        %v394 = vrot.slane %v393, 4
        %v395 = vadd.f32 %v393, %v394
        %v396 = vrot.slane %v395, 2
        %v397 = vadd.f32 %v395, %v396
        %v398 = vrot.slane %v397, 1
        %v399 = vadd.f32 %v397, %v398
        %s400 = vtos %v399
        %v401 = vstv %s400
        %v402 = vld [vmem:[#allocation5] sm:$0x1]
        %v403 = vsel %vm390, %v402, 0.0
        %404 = vadd.xlane.f32.xlu0 %v403
        %v405 = vpop.xlane.xlu0 %404
        %v406 = vrot.slane %v405, 4
        %v407 = vadd.f32 %v405, %v406
        %v408 = vrot.slane %v407, 2
        %v409 = vadd.f32 %v407, %v408
        %v410 = vrot.slane %v409, 1
        %v411 = vadd.f32 %v409, %v410
        %s412 = vtos %v411
        %v413 = vstv %s412
        %vm414 = vcmask 7168
        %v415 = vsel %vm414, %v376, %v388
        %vm416 = vcmask 15360
        %v417 = vsel %vm416, %v415, %v401
        %vm418 = vcmask 23552
        %v419 = vsel %vm418, %v417, %v413
        %420 = vst [vmem:[%s283] sm:$0xff] 0.0
        %vm421 = vcmask 24576
        %422 = vst.msk [vmem:[%s283] sm:$0x1] %vm421, %v419
      $region44: #{pose_model_forward.1} parent=35 // pred_fallthru
        _
      %p423 = scmp.lt.s32.totalorder %s19, 1
      %s424 = scalar_select %p423, %s19, 1
      %s425 = smul.addr %s424, 8
      %s426 = scalar_lea.vmem %s4, %s425
      // Predicated region
      $region45: #{pose_model_forward.1} parent=35 // pred_check
        %p427 = pneg %p157
      $region46: #{pose_model_forward.1} parent=35 // pred_check_branch
        %429 = sbr.rel (%p427) target = $region48
      $region47: #{pose_model_forward.1} parent=35 // pred_region
        _
      $region48: #{pose_model_forward.1} parent=35 // pred_fallthru
        _
    $region36: #{pose_model_forward.1} parent=5 // pred_fallthru
      _
    %p430 = scmp.le.s32.totalorder 2, %s10
    // Predicated region
    $region49: #{pose_model_forward.1} parent=5 // pred_check
      %p431 = pneg %p430
    $region50: #{pose_model_forward.1} parent=5 // pred_check_branch
      %433 = sbr.rel (%p431) target = $region52
    $region51: #{pose_model_forward.1} parent=5 // pred_region
      %s434 = ssub.s32 %s10, 2
      // Predicated region
      $region53: #{pose_model_forward.1} parent=51 // pred_check
        %p435 = pneg %p163
      $region54: #{pose_model_forward.1} parent=51 // pred_check_branch
        %437 = sbr.rel (%p435) target = $region56
      $region55: #{pose_model_forward.1} parent=51 // pred_region
        %p438 = scmp.lt.s32.totalorder %s21, 1
        %s439 = scalar_select %p438, %s21, 1
        %s440 = smul.addr %s439, 8
        %s441 = scalar_lea.vmem %s4, %s440
      $region56: #{pose_model_forward.1} parent=51 // pred_fallthru
        _
    $region52: #{pose_model_forward.1} parent=5 // pred_fallthru
      _
  $region6: #{pose_model_forward.1} parent=0 // loop_footer
    %s14 = sadd.s32 1, %s10
  $region7: #{pose_model_forward.1} parent=0 // loop_footer_branch
    %9 = sbr.rel target = $region3
  $region8: #{pose_model_forward.1} parent=0 // loop_exit
    _

</llo_original>
